<compile_context>
chip_gen: v7x
topology: tpu7x:2x2x1
jax: 0.10.0
libtpu: 0.0.40
codegen_flags: <defaults>
</compile_context>

<pallas_src>
import functools

import jax
import jax.numpy as jnp
from jax.experimental import pallas as pl
from jax.experimental.pallas import tpu as pltpu


def _head_kernel(lw_ref, hs_ref, wt_ref, b_ref, out_ref, acc_ref):
    """One (token-tile, layer) grid step of the ChaiiModel1008 QA head.

    lw_ref : (L,)     softmax(layer_weights), f32, SMEM
    hs_ref : (TT, H)  hidden-state tile of layer l (native dtype), VMEM
    wt_ref : (2, H)   output projection weight (torch layout), VMEM
    b_ref  : (2, 1)   output projection bias, VMEM
    out_ref: (2, TT)  row 0 = start_logits, row 1 = end_logits (lane-dense)
    acc_ref: (2, TT)  f32 accumulator (VMEM scratch), resident across layers
    """
    l = pl.program_id(1)

    @pl.when(l == 0)
    def _init():
        acc_ref[...] = jnp.zeros_like(acc_ref)

    # Fold the 2-wide projection into the layer reduction on the MXU:
    #   partial_(2,TT) = W_(2,H) @ hs_l_(TT,H)^T   (contract on H, f32 acc)
    #   acc           += softmax(layer_weights)[l] * partial
    # No (TT, H) f32 temp and no per-layer full-tile VPU cast/FMA pass.
    wt = wt_ref[...].astype(hs_ref.dtype)            # tiny (2, H) cast
    partial = jax.lax.dot_general(
        wt, hs_ref[...],
        dimension_numbers=(((1,), (1,)), ((), ())),
        preferred_element_type=jnp.float32)          # (2, TT) f32
    acc_ref[...] += lw_ref[l] * partial

    @pl.when(l == pl.num_programs(1) - 1)
    def _finalize():
        out_ref[...] = (acc_ref[...] + b_ref[...]).astype(out_ref.dtype)


def _pick_token_tile(n_tokens, hidden, bytes_per_elem, vmem_budget):
    """Largest token tile that divides T, is a multiple of 128 (lane-dense,
    unmasked output stores), and whose double-buffered per-layer hidden-state
    tile fits the VMEM budget.  Falls back to a single block for tiny shapes.

    The budget is sized per-TensorCore against v7x's 64 MiB VMEM; v5e/v6e
    (128 MiB) can pass a larger budget, but the window is already small since
    only one layer tile (not all 24) is resident.
    """
    for cand in (4096, 2048, 1024, 512, 256, 128):
        if n_tokens % cand == 0 and (
                2 * cand * hidden * bytes_per_elem <= vmem_budget):
            return cand
    return n_tokens


@functools.partial(jax.jit, static_argnames=("token_tile", "vmem_budget_bytes"))
def chaii_head(hidden_states, layer_weights, out_weight, out_bias,
               token_tile=None, vmem_budget_bytes=24 * 1024 * 1024):
    """hidden_states: (L, B, S, H) in its native dtype (f32 or bf16);
    out_weight: (2, H); out_bias: (2,).

    Returns (start_logits, end_logits), each (B, S) float32.
    """
    L, B, S, H = hidden_states.shape
    T = B * S
    hs_dtype = hidden_states.dtype
    hs_bytes = jnp.dtype(hs_dtype).itemsize

    tt = (_pick_token_tile(T, H, hs_bytes, vmem_budget_bytes)
          if token_tile is None else token_tile)
    assert T % tt == 0, "token_tile must divide B*S"
    assert tt == T or tt % 128 == 0, (
        "token_tile must be a multiple of 128 (lane-dense output) or equal B*S")

    # No wrapper-side dtype cast of the dominant stream: an astype here would
    # add a full extra HBM read+write pass on an already HBM-bound workload.
    hs_flat = hidden_states.reshape(L, T, H)                 # view, no copy
    lw = jax.nn.softmax(layer_weights.astype(jnp.float32))   # (L,) grid-inv.
    wt = out_weight.astype(jnp.float32)                      # (2, H)
    b2 = out_bias.astype(jnp.float32).reshape(2, 1)          # (2, 1)

    # VMEM accounting: double-buffered per-layer hidden tile + double-buffered
    # output tile + weights/bias + f32 accumulator scratch + headroom.
    vmem_limit = int(2 * tt * H * hs_bytes          # hidden tile (x2 buffers)
                     + 2 * 2 * tt * 4               # (2, tt) output (x2)
                     + 2 * (2 * H * 4 + 2 * 4)      # weight + bias (x2)
                     + 2 * tt * 4                   # (2, tt) f32 scratch
                     + (4 << 20))                   # compiler headroom
    vmem_limit = max(vmem_limit, 16 << 20)

    grid = (T // tt, L)
    logits_t = pl.pallas_call(
        _head_kernel,
        out_shape=jax.ShapeDtypeStruct((2, T), jnp.float32),
        grid_spec=pltpu.PrefetchScalarGridSpec(
            num_scalar_prefetch=0,
            grid=grid,
            in_specs=[
                # softmaxed layer weights: scalar table in SMEM
                pl.BlockSpec(memory_space=pltpu.MemorySpace.SMEM),
                # one layer's token tile per grid step (layer dim squeezed)
                pl.BlockSpec((pl.Squeezed(), tt, H), lambda i, l: (l, i, 0)),
                # output projection weight / bias (grid-invariant)
                pl.BlockSpec((2, H), lambda i, l: (0, 0)),
                pl.BlockSpec((2, 1), lambda i, l: (0, 0)),
            ],
            # same output block across the layer axis -> resident accumulator
            out_specs=pl.BlockSpec((2, tt), lambda i, l: (0, i)),
            scratch_shapes=[pltpu.VMEM((2, tt), jnp.float32)],
        ),
        compiler_params=pltpu.CompilerParams(
            # token axis independent -> parallel (megacore); layer axis is the
            # reduction -> arbitrary.
            # TODO(synk): on v7x consider pltpu.CORE_PARALLEL on the token axis
            #             to guarantee both TensorCores stream HBM.
            dimension_semantics=("parallel", "arbitrary"),
            vmem_limit_bytes=vmem_limit),
    )(lw, hs_flat, wt, b2)

    start_logits = logits_t[0].reshape(B, S)
    end_logits = logits_t[1].reshape(B, S)
    return start_logits, end_logits


def _reference(hidden_states, layer_weights, out_weight, out_bias):
    """Pure-JAX f32 reference of the eval-mode forward."""
    w = jax.nn.softmax(layer_weights.astype(jnp.float32))
    hs = hidden_states.astype(jnp.float32)
    cls_out = jnp.sum(w[:, None, None, None] * hs, axis=0)            # (B,S,H)
    logits = jnp.matmul(cls_out, out_weight.astype(jnp.float32).T,
                        precision=jax.lax.Precision.HIGHEST)
    logits = logits + out_bias.astype(jnp.float32)
    return logits[..., 0], logits[..., 1]


def _init_params(key, hidden_size, n_weights=24):
    """Deterministic param init mirroring the PyTorch __init__."""
    # layer_weights: zeros, all but the last set to -3
    lw = jnp.zeros((n_weights,), jnp.float32).at[:-1].set(-3.0)

    # nn.Linear(hidden_size, 2): weight (2, H) with xavier_uniform_.
    k_w, k_b = jax.random.split(key)
    bound = (6.0 / (hidden_size + 2)) ** 0.5
    w_out = jax.random.uniform(k_w, (2, hidden_size), jnp.float32,
                               minval=-bound, maxval=bound)
    b_bound = 1.0 / (hidden_size ** 0.5)
    b_out = jax.random.uniform(k_b, (2,), jnp.float32,
                               minval=-b_bound, maxval=b_bound)
    return lw, w_out, b_out


if __name__ == "__main__":
    L = 24
    key = jax.random.PRNGKey(0)
    k_hs1, k_p1, k_hs2, k_p2 = jax.random.split(key, 4)

    # --- test 1: small smoke test (single token tile, tt == T) ------------
    B, S, H = 2, 8, 32
    hidden_states = jax.random.normal(k_hs1, (L, B, S, H), jnp.float32)
    layer_weights, out_weight, out_bias = _init_params(k_p1, H, L)

    start_logits, end_logits = chaii_head(
        hidden_states, layer_weights, out_weight, out_bias)
    jax.block_until_ready((start_logits, end_logits))

    ref_s, ref_e = _reference(hidden_states, layer_weights,
                              out_weight, out_bias)
    assert start_logits.shape == (B, S) and end_logits.shape == (B, S)
    assert jnp.allclose(start_logits, ref_s, atol=1e-2, rtol=1e-2)
    assert jnp.allclose(end_logits, ref_e, atol=1e-2, rtol=1e-2)

    # --- test 2: tiled path (multiple token tiles + layer grid reduction),
    #             bf16 hidden states as if emitted by the backbone ----------
    B2, S2, H2 = 2, 512, 256
    hidden_states2 = jax.random.normal(
        k_hs2, (L, B2, S2, H2), jnp.float32).astype(jnp.bfloat16)
    lw2, w2, b2 = _init_params(k_p2, H2, L)

    s2, e2 = chaii_head(hidden_states2, lw2, w2, b2, token_tile=256)
    jax.block_until_ready((s2, e2))

    ref_s2, ref_e2 = _reference(hidden_states2, lw2, w2, b2)
    assert s2.shape == (B2, S2) and e2.shape == (B2, S2)
    assert jnp.allclose(s2, ref_s2, atol=5e-2, rtol=5e-2)
    assert jnp.allclose(e2, ref_e2, atol=5e-2, rtol=5e-2)

    print("KERNEL_OK")
</pallas_src>

<mosaic_0001>
module attributes {stable_mosaic.version = 11 : i64} {
  func.func @_head_kernel(%arg0: i32, %arg1: i32, %arg2: memref<24xf32, #tpu.memory_space<smem>>, %arg3: memref<1x16x32xf32, #tpu.memory_space<vmem>>, %arg4: memref<2x32xf32, #tpu.memory_space<vmem>>, %arg5: memref<2x1xf32, #tpu.memory_space<vmem>>, %arg6: memref<2x16xf32, #tpu.memory_space<vmem>>, %arg7: memref<2x16xf32, #tpu.memory_space<vmem>>) attributes {dimension_semantics = [#tpu.dimension_semantics<parallel>, #tpu.dimension_semantics<arbitrary>], iteration_bounds = array<i64: 1, 24>, scalar_prefetch = 0 : i64, scratch_operands = 1 : i64, tpu.core_type = #tpu.core_type<tc>, window_params = [{transform_indices = @transform_0, window_bounds = array<i64: 24>}, {transform_indices = @transform_1, window_bounds = array<i64: 1, 16, 32>}, {pipeline_mode = #tpu.pipeline_mode<synchronous>, transform_indices = @transform_2, window_bounds = array<i64: 2, 32>}, {pipeline_mode = #tpu.pipeline_mode<synchronous>, transform_indices = @transform_3, window_bounds = array<i64: 2, 1>}, {transform_indices = @transform_4, window_bounds = array<i64: 2, 16>}]} {
    %c0_i32 = arith.constant 0 : i32
    %0 = arith.cmpi eq, %arg1, %c0_i32 : i32
    %1 = arith.extui %0 : i1 to i32
    %c0_i32_0 = arith.constant 0 : i32
    %2 = arith.cmpi ne, %1, %c0_i32_0 : i32
    scf.if %2 {
      %cst_10 = arith.constant 0.000000e+00 : f32
      %17 = vector.broadcast %cst_10 : f32 to vector<2x16xf32>
      %c0_11 = arith.constant 0 : index
      %c0_12 = arith.constant 0 : index
      %18 = vector.load %arg7[%c0_11, %c0_12] : memref<2x16xf32, #tpu.memory_space<vmem>>, vector<2x16xf32>
      tpu.vector_store %arg7[%c0_11, %c0_12], %17 {strides = array<i32>} : memref<2x16xf32, #tpu.memory_space<vmem>>, vector<2x16xf32>,
    } else {
    }
    %c0 = arith.constant 0 : index
    %c0_1 = arith.constant 0 : index
    %3 = vector.load %arg4[%c0, %c0_1] : memref<2x32xf32, #tpu.memory_space<vmem>>, vector<2x32xf32>
    %c0_2 = arith.constant 0 : index
    %c0_3 = arith.constant 0 : index
    %c0_4 = arith.constant 0 : index
    %4 = vector.load %arg3[%c0_2, %c0_3, %c0_4] : memref<1x16x32xf32, #tpu.memory_space<vmem>>, vector<1x16x32xf32>
    %5 = vector.shape_cast %4 : vector<1x16x32xf32> to vector<16x32xf32>
    %cst = arith.constant dense<0.000000e+00> : vector<2x16xf32>
    %6 = tpu.matmul %3, %5, %cst {dimension_numbers = #tpu.dot_dimension_numbers<[1], [1], [0], [0], [0, 0, 1, 0], [], []>} : vector<2x32xf32>, vector<16x32xf32>, vector<2x16xf32> -> vector<2x16xf32>
    %c0_5 = arith.constant 0 : index
    %c0_6 = arith.constant 0 : index
    %7 = vector.load %arg7[%c0_5, %c0_6] : memref<2x16xf32, #tpu.memory_space<vmem>>, vector<2x16xf32>
    %8 = arith.index_cast %arg1 : i32 to index
    %9 = memref.load %arg2[%8] : memref<24xf32, #tpu.memory_space<smem>>
    %10 = vector.broadcast %9 : f32 to vector<2x16xf32>
    %11 = arith.mulf %10, %6 : vector<2x16xf32>
    %12 = arith.addf %7, %11 : vector<2x16xf32>
    %c0_7 = arith.constant 0 : index
    %c0_8 = arith.constant 0 : index
    %13 = vector.load %arg7[%c0_7, %c0_8] : memref<2x16xf32, #tpu.memory_space<vmem>>, vector<2x16xf32>
    tpu.vector_store %arg7[%c0_7, %c0_8], %12 {strides = array<i32>} : memref<2x16xf32, #tpu.memory_space<vmem>>, vector<2x16xf32>,
    %c23_i32 = arith.constant 23 : i32
    %14 = arith.cmpi eq, %arg1, %c23_i32 : i32
    %15 = arith.extui %14 : i1 to i32
    %c0_i32_9 = arith.constant 0 : i32
    %16 = arith.cmpi ne, %15, %c0_i32_9 : i32
    scf.if %16 {
      %c0_10 = arith.constant 0 : index
      %c0_11 = arith.constant 0 : index
      %17 = vector.load %arg7[%c0_10, %c0_11] : memref<2x16xf32, #tpu.memory_space<vmem>>, vector<2x16xf32>
      %c0_12 = arith.constant 0 : index
      %c0_13 = arith.constant 0 : index
      %18 = vector.load %arg5[%c0_12, %c0_13] : memref<2x1xf32, #tpu.memory_space<vmem>>, vector<2x1xf32>
      %19 = vector.broadcast %18 : vector<2x1xf32> to vector<2x16xf32>
      %20 = arith.addf %17, %19 : vector<2x16xf32>
      %c0_14 = arith.constant 0 : index
      %c0_15 = arith.constant 0 : index
      %21 = vector.load %arg6[%c0_14, %c0_15] : memref<2x16xf32, #tpu.memory_space<vmem>>, vector<2x16xf32>
      tpu.vector_store %arg6[%c0_14, %c0_15], %20 {strides = array<i32>} : memref<2x16xf32, #tpu.memory_space<vmem>>, vector<2x16xf32>,
    } else {
    }
    return
  }
  func.func @transform_0(%arg0: i32, %arg1: i32) -> i32 {
    %c0_i32 = arith.constant 0 : i32
    %c0_i32_0 = arith.constant 0 : i32
    return %c0_i32 : i32
  }
  func.func @transform_1(%arg0: i32, %arg1: i32) -> (i32, i32, i32) {
    %c0_i32 = arith.constant 0 : i32
    %c0_i32_0 = arith.constant 0 : i32
    return %arg1, %arg0, %c0_i32 : i32, i32, i32
  }
  func.func @transform_2(%arg0: i32, %arg1: i32) -> (i32, i32) {
    %c0_i32 = arith.constant 0 : i32
    %c0_i32_0 = arith.constant 0 : i32
    %c0_i32_1 = arith.constant 0 : i32
    return %c0_i32, %c0_i32_0 : i32, i32
  }
  func.func @transform_3(%arg0: i32, %arg1: i32) -> (i32, i32) {
    %c0_i32 = arith.constant 0 : i32
    %c0_i32_0 = arith.constant 0 : i32
    %c0_i32_1 = arith.constant 0 : i32
    return %c0_i32, %c0_i32_0 : i32, i32
  }
  func.func @transform_4(%arg0: i32, %arg1: i32) -> (i32, i32) {
    %c0_i32 = arith.constant 0 : i32
    %c0_i32_0 = arith.constant 0 : i32
    return %c0_i32, %arg0 : i32, i32
  }
}

</mosaic_0001>

<llo_original>
// kernel: squeeze.3
$region0: #{squeeze.3}
  %s0 = inlined_call_operand.vmem [shape: f32[16], index: 0, kind: input, shape index: {}]
  %s1 = inlined_call_operand.hbm [shape: f32[2,8], index: 1, kind: output, shape index: {}]
  $region1: #{squeeze.3} parent=0
    #allocation0 [shape = 'u8[1024]{0}', space=vmem, size = 0x400, scoped, tag = 'operand span for operand 1']
    #allocation1 [shape = 's32[1]{0}', space=sflag, size = 0x4, scoped, tag = 'scoped memory for squeeze.3']
    #allocation2 [shape = 'u8[4096]{0}', space=vmem, size = 0x1000, scoped, tag = 'scoped mem for output reshape']
    #allocation3 [shape = 'u8[4096]{0}', space=vmem, size = 0x1000, scoped, tag = 'scoped mem for input reshape']
    %2 = vsyncpa [#allocation1], 0
    %s4 = sshllo.u32 0, 1
    %v5 = vld [vmem:[%s0] sm:%s4]
    %6 = vst [vmem:[#allocation3] sm:%s4] %v5
    %v7 = vld [vmem:[#allocation3] sm:$0x1]
    %vm8 = vcmask 64512
    %9 = vst.msk [vmem:[#allocation2] sm:$0x1] %vm8, %v7
    %v10 = vld [vmem:[#allocation3] sm:$0x1]
    %11 = vrot.lane.b32.xlu0 %v10, 120
    %v12 = vpop.permute.xlu0 %11
    %vm13 = vcmask 64512
    %s14 = scalar_lea.vmem [#allocation2], 1
    %15 = vst.msk [vmem:[%s14] sm:$0x1] %vm13, %v12
    %s17 = sshllo.u32 0, 2
    %v19 = vld [vmem:[#allocation2] sm:%s17]
    %s20 = sshllo.u32 0, 2
    %21 = vst [vmem:[#allocation0] sm:%s20] %v19
    %s23 = ssub.s32 32, 32
    %24 = vsyncadd [#allocation1], %s23
    %s26 = sshll.u32 [#allocation0], 4
    %s27 = int_to_ptr.vmem [resolvable:$true] %s26
    %29 = dma.vmem_to_hbm [thread:$0]  %s27, 32, %s1, [#allocation1]
    %30 = dma.done [#allocation1], 32
    %31 = vsyncpa [#allocation1], 1

// kernel: chaii_head.1
$region0: #{chaii_head.1}
  #allocation0 [shape = 'u32[]', space=smem, size = 0x4, offset = 0x4, fixed_abs, tag = 'smem constant byte address 0x4 - core index']
  #allocation1 [shape = 'u32[144,128]{1,0:T(1,128)}', space=vmem, size = 0x12000, scoped, tag = 'internal scratch']
  #allocation2 [shape = 'f32[2,16]{1,0:T(2,128)}', space=vmem, size = 0x400, scoped, tag = 'scratch operand']
  %s0 = inlined_call_operand.vmem [shape: f32[24], index: 0, kind: input, shape index: {}]
  %s1 = inlined_call_operand.hbm [shape: f32[24,16,32], index: 1, kind: input, shape index: {}]
  %s2 = inlined_call_operand.vmem [shape: f32[2,32], index: 2, kind: input, shape index: {}]
  %s3 = inlined_call_operand.vmem [shape: f32[2,1], index: 3, kind: input, shape index: {}]
  %s4 = inlined_call_operand.vmem [shape: f32[2,16], index: 4, kind: output, shape index: {}]
  %s5 = sld [smem:[#allocation0]]
  $region65: #{chaii_head.1} parent=0
    _
  %s7 = ssub.s32 1, %s5
  %s8 = scalar_select 0, %s7, %s5
  $region1: #{chaii_head.1} parent=0
    #allocation3 [shape = 'u8[512]{0}', space=smem, size = 0x200, scoped, tag = 'input window, operand 0, single buffered']
    #allocation4 [shape = 's32[2]{0}', space=sflag, size = 0x8, scoped, tag = 'scoped memory for chaii_head.1']
    #allocation5 [shape = 's32[2]{0}', space=sflag, size = 0x8, scoped, tag = 'scoped memory for chaii_head.1']
    #allocation6 [shape = 'u8[16384]{0}', space=vmem, size = 0x4000, scoped, tag = 'input window, operand 1']
    %9 = vsyncpa [#allocation5], 0
    %10 = vsyncpa [#allocation4], 0
    %s11 = scalar_lea.sflag [#allocation4], 1
    %12 = vsyncpa %s11, 0
    loop: start=0, step=1, limit=26
    $region2: #{chaii_head.1} parent=1 // loop_pre_header
      _
    $region3: #{chaii_head.1} parent=1 // loop_header
      %s14 = sphi 0, %s18
      %p15 = scmp.ge.s32.totalorder %s14, 26
      %s21 = sphi 0, %s33
      %s22 = sphi 0, %s29
      %s23 = sphi 0, %s21
      %s24 = sphi 0, %s22
      %s25 = sphi 0, %s23
      %s26 = sphi 0, %s24
      %s34 = sphi 0, %s34
      %s36 = sphi 0, %s34
      %s37 = sphi 0, %s36
      %s51 = sphi 0, %s37
      %s59 = sphi 0, %s61
      %s62 = sphi 0, %s59
      %s63 = sphi 0, %s62
      %s79 = sphi 0, %s63
      %s83 = sphi 0, %s83
      %s85 = sphi 0, %s83
      %s86 = sphi 0, %s85
      %s100 = sphi 0, %s86
      %s104 = sphi 0, %s104
      %s106 = sphi 0, %s104
      %s107 = sphi 0, %s106
      %s121 = sphi 0, %s107
      %s127 = sphi 0, %s129
      %s130 = sphi 0, %s127
      %s131 = sphi 0, %s130
      %s147 = sphi 0, %s131
    $region4: #{chaii_head.1} parent=1 // loop_header_branch
      %17 = sbr.rel (%p15) target = $region8
    $region5: #{chaii_head.1} parent=1 // loop_body
      %s19 = ssub.s32 %s14, 1
      %s20 = ssub.s32 %s14, 2
      %s27 = sadd.s32 1, %s22
      %p28 = scmp.ge.s32.totalorder %s27, 24
      %s29 = scalar_select %p28, 0, %s27
      %s30 = sadd.s32 1, %s21
      %s31 = scalar_select %p28, %s30, %s21
      %p32 = scmp.ge.s32.totalorder %s31, 1
      %s33 = scalar_select %p32, 0, %s31
      %s35 = sadd.s32 %s34, 1
      %p38 = scmp.eq.s32.totalorder %s14, 23
      %p39 = scmp.ne.s32.totalorder %s34, %s36
      %p40 = scmp.eq.s32.totalorder %s14, 0
      %p41 = por %p39, %p40
      %p42 = scmp.ne.s32.totalorder %s34, %s36
      %p43 = scmp.eq.s32.totalorder %s19, 23
      %p44 = por %p42, %p43
      %p45 = scmp.ne.s32.totalorder %s36, %s37
      %p46 = scmp.eq.s32.totalorder %s19, 0
      %p47 = por %p45, %p46
      %p48 = scmp.ne.s32.totalorder %s36, %s37
      %p49 = scmp.eq.s32.totalorder %s20, 23
      %p50 = por %p48, %p49
      %p52 = scmp.ne.s32.totalorder %s37, %s51
      %p53 = scmp.eq.s32.totalorder %s20, 0
      %p54 = por %p52, %p53
      %s55 = ssub.s32 %s22, %s29
      %s56 = ssub.s32 %s21, %s33
      %s57 = sor.u32 %s55, %s56
      %p58 = scmp.eq.s32.totalorder %s57, 0
      %s60 = sadd.s32 %s59, 1
      %s61 = scalar_select %p58, %s59, %s60
      %p64 = pneg %p58
      %p65 = scmp.eq.s32.totalorder %s14, 23
      %p66 = por %p64, %p65
      %p67 = scmp.ne.s32.totalorder %s59, %s62
      %p68 = scmp.eq.s32.totalorder %s14, 0
      %p69 = por %p67, %p68
      %p70 = scmp.ne.s32.totalorder %s59, %s62
      %p71 = scmp.eq.s32.totalorder %s19, 23
      %p72 = por %p70, %p71
      %p73 = scmp.ne.s32.totalorder %s62, %s63
      %p74 = scmp.eq.s32.totalorder %s19, 0
      %p75 = por %p73, %p74
      %p76 = scmp.ne.s32.totalorder %s62, %s63
      %p77 = scmp.eq.s32.totalorder %s20, 23
      %p78 = por %p76, %p77
      %p80 = scmp.ne.s32.totalorder %s63, %s79
      %p81 = scmp.eq.s32.totalorder %s20, 0
      %p82 = por %p80, %p81
      %s84 = sadd.s32 %s83, 1
      %p87 = scmp.eq.s32.totalorder %s14, 23
      %p88 = scmp.ne.s32.totalorder %s83, %s85
      %p89 = scmp.eq.s32.totalorder %s14, 0
      %p90 = por %p88, %p89
      %p91 = scmp.ne.s32.totalorder %s83, %s85
      %p92 = scmp.eq.s32.totalorder %s19, 23
      %p93 = por %p91, %p92
      %p94 = scmp.ne.s32.totalorder %s85, %s86
      %p95 = scmp.eq.s32.totalorder %s19, 0
      %p96 = por %p94, %p95
      %p97 = scmp.ne.s32.totalorder %s85, %s86
      %p98 = scmp.eq.s32.totalorder %s20, 23
      %p99 = por %p97, %p98
      %p101 = scmp.ne.s32.totalorder %s86, %s100
      %p102 = scmp.eq.s32.totalorder %s20, 0
      %p103 = por %p101, %p102
      %s105 = sadd.s32 %s104, 1
      %p108 = scmp.eq.s32.totalorder %s14, 23
      %p109 = scmp.ne.s32.totalorder %s104, %s106
      %p110 = scmp.eq.s32.totalorder %s14, 0
      %p111 = por %p109, %p110
      %p112 = scmp.ne.s32.totalorder %s104, %s106
      %p113 = scmp.eq.s32.totalorder %s19, 23
      %p114 = por %p112, %p113
      %p115 = scmp.ne.s32.totalorder %s106, %s107
      %p116 = scmp.eq.s32.totalorder %s19, 0
      %p117 = por %p115, %p116
      %p118 = scmp.ne.s32.totalorder %s106, %s107
      %p119 = scmp.eq.s32.totalorder %s20, 23
      %p120 = por %p118, %p119
      %p122 = scmp.ne.s32.totalorder %s107, %s121
      %p123 = scmp.eq.s32.totalorder %s20, 0
      %p124 = por %p122, %p123
      %s125 = ssub.s32 %s21, %s33
      %p126 = scmp.eq.s32.totalorder %s125, 0
      %s128 = sadd.s32 %s127, 1
      %s129 = scalar_select %p126, %s127, %s128
      %p132 = pneg %p126
      %p133 = scmp.eq.s32.totalorder %s14, 23
      %p134 = por %p132, %p133
      %p135 = scmp.ne.s32.totalorder %s127, %s130
      %p136 = scmp.eq.s32.totalorder %s14, 0
      %p137 = por %p135, %p136
      %p138 = scmp.ne.s32.totalorder %s127, %s130
      %p139 = scmp.eq.s32.totalorder %s19, 23
      %p140 = por %p138, %p139
      %p141 = scmp.ne.s32.totalorder %s130, %s131
      %p142 = scmp.eq.s32.totalorder %s19, 0
      %p143 = por %p141, %p142
      %p144 = scmp.ne.s32.totalorder %s130, %s131
      %p145 = scmp.eq.s32.totalorder %s20, 23
      %p146 = por %p144, %p145
      %p148 = scmp.ne.s32.totalorder %s131, %s147
      %p149 = scmp.eq.s32.totalorder %s20, 0
      %p150 = por %p148, %p149
      %p151 = scmp.le.s32.totalorder 1, %s14
      %p152 = scmp.lt.s32.totalorder %s14, 25
      %p153 = pnand %p151, %p152
      %p154 = pneg %p153
      // Predicated region
      $region9: #{chaii_head.1} parent=5 // pred_check
        _
      $region10: #{chaii_head.1} parent=5 // pred_check_branch
        %156 = sbr.rel (%p153) target = $region12
      $region11: #{chaii_head.1} parent=5 // pred_region
        %s157 = ssub.s32 %s14, 1
        // Predicated region
        $region13: #{chaii_head.1} parent=11 // pred_check
          %p158 = pneg %p47
        $region14: #{chaii_head.1} parent=11 // pred_check_branch
          %160 = sbr.rel (%p158) target = $region16
        $region15: #{chaii_head.1} parent=11 // pred_region
          %s162 = ssub.s32 16, 16
          %163 = vsyncadd [#allocation5], %s162
          %s165 = sshll.u32 %s0, 4
          %s166 = int_to_ptr.vmem [resolvable:$true] %s165
          %168 = dma.vmem_to_smem %s166, 16, [#allocation3], [#allocation5]
        $region16: #{chaii_head.1} parent=11 // pred_fallthru
          _
        // Predicated region
        $region17: #{chaii_head.1} parent=11 // pred_check
          %p169 = pneg %p96
        $region18: #{chaii_head.1} parent=11 // pred_check_branch
          %171 = sbr.rel (%p169) target = $region20
        $region19: #{chaii_head.1} parent=11 // pred_region
          _
        $region20: #{chaii_head.1} parent=11 // pred_fallthru
          _
        // Predicated region
        $region21: #{chaii_head.1} parent=11 // pred_check
          %p172 = pneg %p117
        $region22: #{chaii_head.1} parent=11 // pred_check_branch
          %174 = sbr.rel (%p172) target = $region24
        $region23: #{chaii_head.1} parent=11 // pred_region
          _
        $region24: #{chaii_head.1} parent=11 // pred_fallthru
          _
      $region12: #{chaii_head.1} parent=5 // pred_fallthru
        _
      %p175 = scmp.lt.s32.totalorder %s14, 24
      // Predicated region
      $region25: #{chaii_head.1} parent=5 // pred_check
        %p176 = pneg %p175
      $region26: #{chaii_head.1} parent=5 // pred_check_branch
        %178 = sbr.rel (%p176) target = $region28
      $region27: #{chaii_head.1} parent=5 // pred_region
        // Predicated region
        $region29: #{chaii_head.1} parent=27 // pred_check
          %p179 = pneg %p69
        $region30: #{chaii_head.1} parent=27 // pred_check_branch
          %181 = sbr.rel (%p179) target = $region32
        $region31: #{chaii_head.1} parent=27 // pred_region
          %s182 = sand.u32 %s59, 1
          %s183 = scalar_lea.sflag [#allocation4], %s182
          %s184 = sand.u32 %s59, 1
          %s185 = smul.addr %s184, 16
          %s186 = scalar_lea.vmem [#allocation6], %s185
          %s187 = smul.u32 2, %s21
          %s189 = ssub.s32 256, 256
          %190 = vsyncadd %s183, %s189
          %s191 = smul.addr %s22, 2
          %s192 = sadd.s32 %s187, %s191
          %s193 = smul.addr %s192, 128
          %s194 = scalar_lea.hbm %s1, %s193
          %s195 = sshll.u32 %s186, 4
          %s196 = int_to_ptr.vmem [resolvable:$true] %s195
          %201 = dma.hbm_to_vmem [thread:$0]  %s194, 256, %s196, %s183, 128, 128, 8
        $region32: #{chaii_head.1} parent=27 // pred_fallthru
          _
      $region28: #{chaii_head.1} parent=5 // pred_fallthru
        _
      %p202 = scmp.le.s32.totalorder 1, %s14
      %p203 = scmp.lt.s32.totalorder %s14, 25
      %p204 = pnand %p202, %p203
      %p205 = pneg %p204
      // Predicated region
      $region33: #{chaii_head.1} parent=5 // pred_check
        _
      $region34: #{chaii_head.1} parent=5 // pred_check_branch
        %207 = sbr.rel (%p204) target = $region36
      $region35: #{chaii_head.1} parent=5 // pred_region
        %s208 = ssub.s32 %s14, 1
        // Predicated region
        $region37: #{chaii_head.1} parent=35 // pred_check
          %p209 = pneg %p47
        $region38: #{chaii_head.1} parent=35 // pred_check_branch
          %211 = sbr.rel (%p209) target = $region40
        $region39: #{chaii_head.1} parent=35 // pred_region
          %212 = dma.done [#allocation5], 16
        $region40: #{chaii_head.1} parent=35 // pred_fallthru
          _
        %s213 = sand.u32 %s62, 1
        %s214 = scalar_lea.sflag [#allocation4], %s213
        %s215 = sand.u32 %s62, 1
        %s216 = smul.addr %s215, 16
        %s217 = scalar_lea.vmem [#allocation6], %s216
        // Predicated region
        $region41: #{chaii_head.1} parent=35 // pred_check
          %p218 = pneg %p75
        $region42: #{chaii_head.1} parent=35 // pred_check_branch
          %220 = sbr.rel (%p218) target = $region44
        $region43: #{chaii_head.1} parent=35 // pred_region
          %221 = dma.done %s214, 256
        $region44: #{chaii_head.1} parent=35 // pred_fallthru
          _
        %222 = sfence
        %p223 = pneg %p47
        %p224 = pneg %p44
        %s225 = sand.u32 %s62, 1
        %s226 = scalar_lea.sflag [#allocation4], %s225
        %s227 = sand.u32 %s62, 1
        %s228 = smul.addr %s227, 16
        %s229 = scalar_lea.vmem [#allocation6], %s228
        %p230 = pneg %p75
        %p231 = pneg %p72
        %p232 = pneg %p96
        %p233 = pneg %p93
        %p234 = pneg %p117
        %p235 = pneg %p114
        %p236 = pneg %p143
        %p237 = pneg %p140
        %p238 = scmp.lt.s32.totalorder %s23, 0
        %s239 = scalar_select %p238, %s23, 0
        %s240 = smul.addr %s239, 2
        %s241 = scalar_lea.vmem %s4, %s240
        %s242 = smul.u32 2, %s23
        %p243 = scmp.lt.s32.totalorder %s23, 0
        %s244 = scalar_select %p243, %s23, 0
        %s245 = smul.addr %s244, 2
        %s246 = scalar_lea.vmem %s4, %s245
        %p247 = scmp.eq.s32.totalorder %s24, 0
        // Predicated region
        $region45: #{chaii_head.1} parent=35 // pred_check
          %p248 = pneg %p247
        $region46: #{chaii_head.1} parent=35 // pred_check_branch
          %250 = sbr.rel (%p248) target = $region48
        $region47: #{chaii_head.1} parent=35 // pred_region
          %vm251 = vcmask 123904
          %252 = vst.msk [vmem:[#allocation2] sm:$0x3] %vm251, 0.0
        $region48: #{chaii_head.1} parent=35 // pred_fallthru
          _
        %v253 = vld [vmem:[%s2] sm:$0x3]
        %v254 = vld [vmem:[%s217] sm:$0xff]
        %v255 = vld [vmem:[%s217 + $0x8] sm:$0xff]
        %vm256 = vcmask 261120
        %v258 = vsel %vm256, %v253, 0
        %v261 = vsel %vm256, %v254, 0
        %v264 = vsel %vm256, %v255, 0
        %266 = vmatprep.subr.mxu0 0.0
        %267 = vmatpush1.xpose.msra.mxu0 %v261
        %268 = vmatprep.subr.mxu0 0.0
        %269 = vmatpush1.xpose.msra.mxu0 %v264
        %270 = vmatprep.subr.mxu0 0.0
        %271 = vmatpush1.xpose.msra.mxu0 0.0
        %272 = vmatprep.subr.mxu0 0.0
        %273 = vmatpush1.xpose.msra.mxu0 0.0
        %274 = vmatprep.subr.mxu0 0.0
        %275 = vmatpush1.xpose.msra.mxu0 0.0
        %276 = vmatprep.subr.mxu0 0.0
        %277 = vmatpush1.xpose.msra.mxu0 0.0
        %278 = vmatprep.subr.mxu0 0.0
        %279 = vmatpush1.xpose.msra.mxu0 0.0
        %280 = vmatprep.subr.mxu0 0.0
        %281 = vmatpush1.xpose.msra.mxu0 0.0
        %282 = vmatprep.subr.mxu0 0.0
        %283 = vmatpush1.xpose.msra.mxu0 0.0
        %284 = vmatprep.subr.mxu0 0.0
        %285 = vmatpush1.xpose.msra.mxu0 0.0
        %286 = vmatprep.subr.mxu0 0.0
        %287 = vmatpush1.xpose.msra.mxu0 0.0
        %288 = vmatprep.subr.mxu0 0.0
        %289 = vmatpush1.xpose.msra.mxu0 0.0
        %290 = vmatprep.subr.mxu0 0.0
        %291 = vmatpush1.xpose.msra.mxu0 0.0
        %292 = vmatprep.subr.mxu0 0.0
        %293 = vmatpush1.xpose.msra.mxu0 0.0
        %294 = vmatprep.subr.mxu0 0.0
        %295 = vmatpush1.xpose.msra.mxu0 0.0
        %296 = vmatprep.subr.mxu0 0.0
        %297 = vmatpush1.xpose.msra.mxu0 0.0
        %298 = vmatprep.subr.mxu0 0.0
        %299 = vmatpush1.xpose.msra.mxu0 0.0
        %300 = vmatprep.subr.mxu0 0.0
        %301 = vmatpush1.xpose.msra.mxu0 0.0
        %302 = vmatprep.subr.mxu0 0.0
        %303 = vmatpush1.xpose.msra.mxu0 0.0
        %304 = vmatprep.subr.mxu0 0.0
        %305 = vmatpush1.xpose.msra.mxu0 0.0
        %306 = vmatprep.subr.mxu0 0.0
        %307 = vmatpush1.xpose.msra.mxu0 0.0
        %308 = vmatprep.subr.mxu0 0.0
        %309 = vmatpush1.xpose.msra.mxu0 0.0
        %310 = vmatprep.subr.mxu0 0.0
        %311 = vmatpush1.xpose.msra.mxu0 0.0
        %312 = vmatprep.subr.mxu0 0.0
        %313 = vmatpush1.xpose.msra.mxu0 0.0
        %314 = vmatprep.subr.mxu0 0.0
        %315 = vmatpush1.xpose.msra.mxu0 0.0
        %316 = vmatprep.subr.mxu0 0.0
        %317 = vmatpush1.xpose.msra.mxu0 0.0
        %318 = vmatprep.subr.mxu0 0.0
        %319 = vmatpush1.xpose.msra.mxu0 0.0
        %320 = vmatprep.subr.mxu0 0.0
        %321 = vmatpush1.xpose.msra.mxu0 0.0
        %322 = vmatprep.subr.mxu0 0.0
        %323 = vmatpush1.xpose.msra.mxu0 0.0
        %324 = vmatprep.subr.mxu0 0.0
        %325 = vmatpush1.xpose.msra.mxu0 0.0
        %326 = vmatprep.subr.mxu0 0.0
        %327 = vmatpush1.xpose.msra.mxu0 0.0
        %328 = vmatprep.subr.mxu0 0.0
        %329 = vmatpush1.xpose.msra.mxu0 0.0
        %330 = vmatprep.mubr.f32.mxu0 0.0
        %331 = vmatmul.mubr.f32.gmra.mrb[0].mxu0 %v258
        %v332 = vpop.f32.mrb[0].mxu0
        %v333 = vadd.f32 0.0, %v332
        %v334 = vpop.f32.mrb[0].mxu0
        %335 = vdwg.mxu0
        %v336 = vld [vmem:[#allocation2] sm:$0x3]
        %s337 = sld [smem:[#allocation3 + %s24]]
        %v338 = vstv %s337
        %v339 = vmul.f32 %v338, %v333
        %v340 = vadd.f32 %v336, %v339
        %vm341 = vcmask 123904
        %342 = vst.msk [vmem:[#allocation2] sm:$0x3] %vm341, %v340
        %p343 = scmp.eq.s32.totalorder %s24, 23
        // Predicated region
        $region49: #{chaii_head.1} parent=35 // pred_check
          %p344 = pneg %p343
        $region50: #{chaii_head.1} parent=35 // pred_check_branch
          %346 = sbr.rel (%p344) target = $region52
        $region51: #{chaii_head.1} parent=35 // pred_region
          %v347 = vld [vmem:[#allocation2] sm:$0x3]
          %v348 = vld [vmem:[%s3] sm:$0x3]
          %350 = vset.pattern.permute.xlu0 0
          %351 = vperm.xlu0 %350, %v348
          %v352 = vpop.permute.xlu0 %351
          %v354 = vadd.f32 %v347, %v352
          %355 = vst.msk [vmem:[%s246] sm:$0x3] %vm341, %v354
        $region52: #{chaii_head.1} parent=35 // pred_fallthru
          _
        %p356 = scmp.lt.s32.totalorder %s23, 0
        %s357 = scalar_select %p356, %s23, 0
        %s358 = smul.addr %s357, 2
        %s359 = scalar_lea.vmem %s4, %s358
        // Predicated region
        $region53: #{chaii_head.1} parent=35 // pred_check
          %p360 = pneg %p140
        $region54: #{chaii_head.1} parent=35 // pred_check_branch
          %362 = sbr.rel (%p360) target = $region56
        $region55: #{chaii_head.1} parent=35 // pred_region
          _
        $region56: #{chaii_head.1} parent=35 // pred_fallthru
          _
        // Predicated region
        $region57: #{chaii_head.1} parent=35 // pred_check
          %p363 = pneg %p140
        $region58: #{chaii_head.1} parent=35 // pred_check_branch
          %365 = sbr.rel (%p363) target = $region60
        $region59: #{chaii_head.1} parent=35 // pred_region
          %p366 = scmp.lt.s32.totalorder %s23, 0
          %s367 = scalar_select %p366, %s23, 0
          %s368 = smul.addr %s367, 2
          %s369 = scalar_lea.vmem %s4, %s368
        $region60: #{chaii_head.1} parent=35 // pred_fallthru
          _
      $region36: #{chaii_head.1} parent=5 // pred_fallthru
        _
      %p370 = scmp.le.s32.totalorder 2, %s14
      // Predicated region
      $region61: #{chaii_head.1} parent=5 // pred_check
        %p371 = pneg %p370
      $region62: #{chaii_head.1} parent=5 // pred_check_branch
        %373 = sbr.rel (%p371) target = $region64
      $region63: #{chaii_head.1} parent=5 // pred_region
        %s374 = ssub.s32 %s14, 2
      $region64: #{chaii_head.1} parent=5 // pred_fallthru
        _
    $region6: #{chaii_head.1} parent=1 // loop_footer
      %s18 = sadd.s32 1, %s14
    $region7: #{chaii_head.1} parent=1 // loop_footer_branch
      %13 = sbr.rel target = $region3
    $region8: #{chaii_head.1} parent=1 // loop_exit
      _
    %375 = vsyncpa [#allocation4], 1
    %s376 = scalar_lea.sflag [#allocation4], 1
    %377 = vsyncpa %s376, 1
    %378 = vsyncpa [#allocation5], 1
    %s379 = scalar_lea.sflag [#allocation5], 1
    %380 = vsyncpa %s379, 1

</llo_original>
